<compile_context>
chip_gen: v7x
topology: tpu7x:2x2x1
jax: 0.10.0
libtpu: 0.0.40
codegen_flags: <defaults>
</compile_context>

<pallas_src>
import functools

import jax
import jax.numpy as jnp
from jax.experimental import pallas as pl
from jax.experimental.pallas import tpu as pltpu

_LANE = 128
_SUB = 16  # bf16 sublane tile; batch tiles are kept multiples of this


def _round_up(v, m):
    return ((v + m - 1) // m) * m


def _mlp_kernel_eval(x_ref, w1_ref, b1_ref, w2_ref, b2_ref, o_ref):
    # hidden = relu(x @ W1 + b1); bf16 operands (weights pre-cast), f32 acc.
    h = jnp.dot(x_ref[...].astype(jnp.bfloat16), w1_ref[...],
                preferred_element_type=jnp.float32)
    h = jnp.maximum(h + b1_ref[...], 0.0)
    # dropout is identity in eval mode
    y = jnp.dot(h.astype(jnp.bfloat16), w2_ref[...],
                preferred_element_type=jnp.float32)
    d_out = o_ref.shape[-1]
    y = y[:, :d_out] + b2_ref[...]          # drop the MXU padding lanes early
    o_ref[...] = jax.nn.sigmoid(y).astype(o_ref.dtype)


def _mlp_kernel_train(x_ref, mask_ref, w1_ref, b1_ref, w2_ref, b2_ref, o_ref):
    h = jnp.dot(x_ref[...].astype(jnp.bfloat16), w1_ref[...],
                preferred_element_type=jnp.float32)
    h = jnp.maximum(h + b1_ref[...], 0.0)
    # mask holds 0.0 or 1/(1-p): dropout + rescale in one multiply.
    h = h * mask_ref[...].astype(jnp.float32)
    y = jnp.dot(h.astype(jnp.bfloat16), w2_ref[...],
                preferred_element_type=jnp.float32)
    d_out = o_ref.shape[-1]
    y = y[:, :d_out] + b2_ref[...]
    o_ref[...] = jax.nn.sigmoid(y).astype(o_ref.dtype)


@functools.partial(jax.jit,
                   static_argnames=("training", "dropout_p", "block_b"))
def biclassification_forward(x, w1, b1, w2, b2, key, *, training=False,
                             dropout_p=0.5, block_b=2048):
    """x: (B, input_dim) f32; weights pre-transposed (in, out). -> (B, D_out) f32."""
    B, D_in = x.shape
    H = w1.shape[1]
    D_out = w2.shape[1]

    # Pad only the second matmul operand width to a full MXU output tile.
    D_out_p = _round_up(D_out, _LANE)
    w2_p = jnp.pad(w2, ((0, 0), (0, D_out_p - D_out)))

    # Cast weights to bf16 once here, not on every grid step inside the kernel.
    w1_bf = w1.astype(jnp.bfloat16)
    w2_bf = w2_p.astype(jnp.bfloat16)

    # Batch tile: large (amortize per-step overhead) but capped so the grid has
    # at least 2 steps (v7x has 2 TensorCores sharing the "parallel" axis).
    TB = min(_round_up(block_b, _SUB),
             max(_SUB, _round_up(pl.cdiv(B, 2), _SUB)))
    grid = (pl.cdiv(B, TB),)   # ragged edge block handled by Pallas; no jnp.pad of x

    resident = lambda shape: pl.BlockSpec(shape, lambda i: (0, 0))
    in_specs = [pl.BlockSpec((TB, D_in), lambda i: (i, 0))]   # x: tiled over batch
    args = [x]
    if training:
        keep = jax.random.bernoulli(key, 1.0 - dropout_p, (B, H))
        mask = jnp.where(keep, 1.0 / (1.0 - dropout_p), 0.0).astype(jnp.bfloat16)
        in_specs.append(pl.BlockSpec((TB, H), lambda i: (i, 0)))
        args.append(mask)
    in_specs += [
        resident((D_in, H)),       # w1 (bf16, VMEM-resident)
        resident((1, H)),          # b1 (f32)
        resident((H, D_out_p)),    # w2 (bf16, padded to 128 lanes)
        resident((1, D_out)),      # b2 (f32, unpadded)
    ]
    args += [w1_bf, b1, w2_bf, b2]

    out_spec = pl.BlockSpec((TB, D_out), lambda i: (i, 0))        # unpadded output
    out_shape = jax.ShapeDtypeStruct((B, D_out), jnp.float32)

    cost = pl.CostEstimate(
        flops=int(2 * B * (D_in * H + H * D_out_p)),
        transcendentals=int(B * D_out),
        bytes_accessed=int(B * (D_in + D_out) * 4
                           + (D_in * H + H * D_out_p) * 2 + (H + D_out) * 4
                           + (B * H * 2 if training else 0)))

    # Explicit scoped-VMEM budget (cheap insurance for big tiles on v5e).
    tile_bytes = TB * (D_in + D_out) * 4 + (TB * H * 2 if training else 0)
    weight_bytes = (D_in * H + H * D_out_p) * 2 + (H + D_out) * 4
    vmem_limit = int(min(max(4 * tile_bytes + 2 * weight_bytes + (4 << 20),
                             32 << 20), 48 << 20))

    compiler_params = pltpu.CompilerParams(
        dimension_semantics=("parallel",),
        vmem_limit_bytes=vmem_limit)

    kernel = _mlp_kernel_train if training else _mlp_kernel_eval
    return pl.pallas_call(
        kernel,
        grid=grid,
        in_specs=in_specs,
        out_specs=out_spec,
        out_shape=out_shape,
        compiler_params=compiler_params,
        cost_estimate=cost,
    )(*args)


def init_params(key, input_dim, output_dim, hidden_dim=256):
    """Init mimicking nn.Linear's uniform(-1/sqrt(fan_in), 1/sqrt(fan_in))."""
    k1, k2, k3, k4 = jax.random.split(key, 4)
    bound1 = 1.0 / float(input_dim) ** 0.5
    bound2 = 1.0 / float(hidden_dim) ** 0.5
    # stored already transposed vs. PyTorch: (in, out)
    w1 = jax.random.uniform(k1, (input_dim, hidden_dim), jnp.float32, -bound1, bound1)
    b1 = jax.random.uniform(k2, (1, hidden_dim), jnp.float32, -bound1, bound1)
    w2 = jax.random.uniform(k3, (hidden_dim, output_dim), jnp.float32, -bound2, bound2)
    b2 = jax.random.uniform(k4, (1, output_dim), jnp.float32, -bound2, bound2)
    return w1, b1, w2, b2


if __name__ == "__main__":
    key = jax.random.PRNGKey(0)
    kx, kx2, kp, kd = jax.random.split(key, 4)

    B, input_dim, hidden_dim, output_dim = 8, 32, 256, 2
    x = jax.random.normal(kx, (B, input_dim), jnp.float32)
    w1, b1, w2, b2 = init_params(kp, input_dim, output_dim, hidden_dim)

    def ref_eval(xv):
        # Same bf16-operand / f32-accumulate path the kernel uses.
        h = jnp.dot(xv.astype(jnp.bfloat16), w1.astype(jnp.bfloat16),
                    preferred_element_type=jnp.float32)
        h = jnp.maximum(h + b1, 0.0)
        y = jnp.dot(h.astype(jnp.bfloat16), w2.astype(jnp.bfloat16),
                    preferred_element_type=jnp.float32)
        return jax.nn.sigmoid(y + b2)

    def ref_train(xv, k):
        keep = jax.random.bernoulli(k, 0.5, (xv.shape[0], hidden_dim))
        h = jnp.dot(xv.astype(jnp.bfloat16), w1.astype(jnp.bfloat16),
                    preferred_element_type=jnp.float32)
        h = jnp.maximum(h + b1, 0.0)
        h = jnp.where(keep, h * 2.0, 0.0)
        y = jnp.dot(h.astype(jnp.bfloat16), w2.astype(jnp.bfloat16),
                    preferred_element_type=jnp.float32)
        return jax.nn.sigmoid(y + b2)

    # eval-mode forward (dropout = identity), single batch tile
    out = jax.block_until_ready(
        biclassification_forward(x, w1, b1, w2, b2, kd, training=False))
    assert out.shape == (B, output_dim)
    assert jnp.allclose(out, ref_eval(x), atol=5e-3), "mismatch vs. JAX reference"

    # eval-mode forward exercising the multi-tile + ragged-edge path
    B2 = 300
    x2 = jax.random.normal(kx2, (B2, input_dim), jnp.float32)
    out2 = jax.block_until_ready(
        biclassification_forward(x2, w1, b1, w2, b2, kd, training=False, block_b=128))
    assert out2.shape == (B2, output_dim)
    assert jnp.allclose(out2, ref_eval(x2), atol=5e-3), "mismatch vs. JAX reference (tiled)"

    # training-mode forward (dropout p=0.5, mask derived from the same key)
    out_tr = jax.block_until_ready(
        biclassification_forward(x2, w1, b1, w2, b2, kd, training=True, block_b=128))
    assert out_tr.shape == (B2, output_dim)
    assert bool(jnp.all(jnp.isfinite(out_tr)))
    assert bool(jnp.all((out_tr >= 0.0) & (out_tr <= 1.0)))
    assert jnp.allclose(out_tr, ref_train(x2, kd), atol=5e-3), "mismatch vs. JAX reference (train)"

    print("KERNEL_OK")
</pallas_src>

<mosaic_0001>
module attributes {stable_mosaic.version = 11 : i64} {
  func.func @_mlp_kernel_eval(%arg0: i32, %arg1: memref<16x32xf32, #tpu.memory_space<vmem>>, %arg2: memref<32x256xbf16, #tpu.memory_space<vmem>>, %arg3: memref<1x256xf32, #tpu.memory_space<vmem>>, %arg4: memref<256x128xbf16, #tpu.memory_space<vmem>>, %arg5: memref<1x2xf32, #tpu.memory_space<vmem>>, %arg6: memref<16x2xf32, #tpu.memory_space<vmem>>) attributes {dimension_semantics = [#tpu.dimension_semantics<parallel>], iteration_bounds = array<i64: 1>, scalar_prefetch = 0 : i64, scratch_operands = 0 : i64, tpu.core_type = #tpu.core_type<tc>, window_params = [{transform_indices = @transform_0, window_bounds = array<i64: 16, 32>}, {pipeline_mode = #tpu.pipeline_mode<synchronous>, transform_indices = @transform_1, window_bounds = array<i64: 32, 256>}, {pipeline_mode = #tpu.pipeline_mode<synchronous>, transform_indices = @transform_2, window_bounds = array<i64: 1, 256>}, {pipeline_mode = #tpu.pipeline_mode<synchronous>, transform_indices = @transform_3, window_bounds = array<i64: 256, 128>}, {pipeline_mode = #tpu.pipeline_mode<synchronous>, transform_indices = @transform_4, window_bounds = array<i64: 1, 2>}, {transform_indices = @transform_5, window_bounds = array<i64: 16, 2>}]} {
    %c0 = arith.constant 0 : index
    %c0_0 = arith.constant 0 : index
    %0 = vector.load %arg1[%c0, %c0_0] : memref<16x32xf32, #tpu.memory_space<vmem>>, vector<16x32xf32>
    %1 = arith.truncf %0 : vector<16x32xf32> to vector<16x32xbf16>
    %c0_1 = arith.constant 0 : index
    %c0_2 = arith.constant 0 : index
    %2 = vector.load %arg2[%c0_1, %c0_2] : memref<32x256xbf16, #tpu.memory_space<vmem>>, vector<32x256xbf16>
    %cst = arith.constant dense<0.000000e+00> : vector<16x256xf32>
    %3 = tpu.matmul %1, %2, %cst {dimension_numbers = #tpu.dot_dimension_numbers<[1], [0], [0], [1], [0, 0, 1, 1], [], []>} : vector<16x32xbf16>, vector<32x256xbf16>, vector<16x256xf32> -> vector<16x256xf32>
    %c0_3 = arith.constant 0 : index
    %c0_4 = arith.constant 0 : index
    %4 = vector.load %arg3[%c0_3, %c0_4] : memref<1x256xf32, #tpu.memory_space<vmem>>, vector<1x256xf32>
    %5 = vector.broadcast %4 : vector<1x256xf32> to vector<16x256xf32>
    %6 = arith.addf %3, %5 : vector<16x256xf32>
    %cst_5 = arith.constant 0.000000e+00 : f32
    %7 = vector.broadcast %cst_5 : f32 to vector<16x256xf32>
    %8 = arith.maximumf %6, %7 : vector<16x256xf32>
    %9 = arith.truncf %8 : vector<16x256xf32> to vector<16x256xbf16>
    %c0_6 = arith.constant 0 : index
    %c0_7 = arith.constant 0 : index
    %10 = vector.load %arg4[%c0_6, %c0_7] : memref<256x128xbf16, #tpu.memory_space<vmem>>, vector<256x128xbf16>
    %cst_8 = arith.constant dense<0.000000e+00> : vector<16x128xf32>
    %11 = tpu.matmul %9, %10, %cst_8 {dimension_numbers = #tpu.dot_dimension_numbers<[1], [0], [0], [1], [0, 0, 1, 1], [], []>} : vector<16x256xbf16>, vector<256x128xbf16>, vector<16x128xf32> -> vector<16x128xf32>
    %12 = vector.extract_strided_slice %11 {offsets = [0, 0], sizes = [16, 2], strides = [1, 1]} : vector<16x128xf32> to vector<16x2xf32>
    %c0_9 = arith.constant 0 : index
    %c0_10 = arith.constant 0 : index
    %13 = vector.load %arg5[%c0_9, %c0_10] : memref<1x2xf32, #tpu.memory_space<vmem>>, vector<1x2xf32>
    %14 = vector.broadcast %13 : vector<1x2xf32> to vector<16x2xf32>
    %15 = arith.addf %12, %14 : vector<16x2xf32>
    %16 = arith.negf %15 : vector<16x2xf32>
    %17 = math.exp %16 : vector<16x2xf32>
    %cst_11 = arith.constant 1.000000e+00 : f32
    %18 = vector.broadcast %cst_11 : f32 to vector<16x2xf32>
    %19 = arith.addf %18, %17 : vector<16x2xf32>
    %20 = arith.divf %18, %19 : vector<16x2xf32>
    %c0_12 = arith.constant 0 : index
    %c0_13 = arith.constant 0 : index
    %21 = vector.load %arg6[%c0_12, %c0_13] : memref<16x2xf32, #tpu.memory_space<vmem>>, vector<16x2xf32>
    tpu.vector_store %arg6[%c0_12, %c0_13], %20 {strides = array<i32>} : memref<16x2xf32, #tpu.memory_space<vmem>>, vector<16x2xf32>,
    return
  }
  func.func @transform_0(%arg0: i32) -> (i32, i32) {
    %c0_i32 = arith.constant 0 : i32
    %c0_i32_0 = arith.constant 0 : i32
    return %arg0, %c0_i32 : i32, i32
  }
  func.func @transform_1(%arg0: i32) -> (i32, i32) {
    %c0_i32 = arith.constant 0 : i32
    %c0_i32_0 = arith.constant 0 : i32
    %c0_i32_1 = arith.constant 0 : i32
    return %c0_i32, %c0_i32_0 : i32, i32
  }
  func.func @transform_2(%arg0: i32) -> (i32, i32) {
    %c0_i32 = arith.constant 0 : i32
    %c0_i32_0 = arith.constant 0 : i32
    %c0_i32_1 = arith.constant 0 : i32
    return %c0_i32, %c0_i32_0 : i32, i32
  }
  func.func @transform_3(%arg0: i32) -> (i32, i32) {
    %c0_i32 = arith.constant 0 : i32
    %c0_i32_0 = arith.constant 0 : i32
    %c0_i32_1 = arith.constant 0 : i32
    return %c0_i32, %c0_i32_0 : i32, i32
  }
  func.func @transform_4(%arg0: i32) -> (i32, i32) {
    %c0_i32 = arith.constant 0 : i32
    %c0_i32_0 = arith.constant 0 : i32
    %c0_i32_1 = arith.constant 0 : i32
    return %c0_i32, %c0_i32_0 : i32, i32
  }
  func.func @transform_5(%arg0: i32) -> (i32, i32) {
    %c0_i32 = arith.constant 0 : i32
    %c0_i32_0 = arith.constant 0 : i32
    return %arg0, %c0_i32 : i32, i32
  }
}

</mosaic_0001>

<llo_original>
// kernel: biclassification_forward.1
$region0: #{biclassification_forward.1}
  #allocation0 [shape = 'u32[]', space=smem, size = 0x4, offset = 0x4, fixed_abs, tag = 'smem constant byte address 0x4 - core index']
  #allocation1 [shape = 'u32[144,128]{1,0:T(1,128)}', space=vmem, size = 0x12000, scoped, tag = 'internal scratch']
  %s0 = inlined_call_operand.vmem [shape: f32[8,32], index: 0, kind: input, shape index: {}]
  %s1 = inlined_call_operand.vmem [shape: bf16[32,256], index: 1, kind: input, shape index: {}]
  %s2 = inlined_call_operand.vmem [shape: f32[1,256], index: 2, kind: input, shape index: {}]
  %s3 = inlined_call_operand.vmem [shape: bf16[256,128], index: 3, kind: input, shape index: {}]
  %s4 = inlined_call_operand.vmem [shape: f32[1,2], index: 4, kind: input, shape index: {}]
  %s5 = inlined_call_operand.vmem [shape: f32[8,2], index: 5, kind: output, shape index: {}]
  %s6 = sld [smem:[#allocation0]]
  $region64: #{biclassification_forward.1} parent=0
    _
  %s8 = ssub.s32 1, %s6
  %s9 = scalar_select 0, %s8, %s6
  $region1: #{biclassification_forward.1} parent=0
    #allocation2 [shape = 'u8[8192]{0}', space=vmem, size = 0x2000, scoped, tag = 'output window, operand 0, single buffered']
    // Predicated region
    $region2: #{biclassification_forward.1} parent=1 // pred_check
      _
    $region3: #{biclassification_forward.1} parent=1 // pred_check_branch
      %11 = sbr.rel (0) target = $region5
    $region4: #{biclassification_forward.1} parent=1 // pred_region
      _
    $region5: #{biclassification_forward.1} parent=1 // pred_fallthru
      _
    // Predicated region
    $region6: #{biclassification_forward.1} parent=1 // pred_check
      _
    $region7: #{biclassification_forward.1} parent=1 // pred_check_branch
      %13 = sbr.rel (0) target = $region9
    $region8: #{biclassification_forward.1} parent=1 // pred_region
      _
    $region9: #{biclassification_forward.1} parent=1 // pred_fallthru
      _
    // Predicated region
    $region10: #{biclassification_forward.1} parent=1 // pred_check
      _
    $region11: #{biclassification_forward.1} parent=1 // pred_check_branch
      %15 = sbr.rel (0) target = $region13
    $region12: #{biclassification_forward.1} parent=1 // pred_region
      _
    $region13: #{biclassification_forward.1} parent=1 // pred_fallthru
      _
    // Predicated region
    $region14: #{biclassification_forward.1} parent=1 // pred_check
      _
    $region15: #{biclassification_forward.1} parent=1 // pred_check_branch
      %17 = sbr.rel (0) target = $region17
    $region16: #{biclassification_forward.1} parent=1 // pred_region
      _
    $region17: #{biclassification_forward.1} parent=1 // pred_fallthru
      _
    // Predicated region
    $region18: #{biclassification_forward.1} parent=1 // pred_check
      _
    $region19: #{biclassification_forward.1} parent=1 // pred_check_branch
      %19 = sbr.rel (0) target = $region21
    $region20: #{biclassification_forward.1} parent=1 // pred_region
      _
    $region21: #{biclassification_forward.1} parent=1 // pred_fallthru
      _
    %v21 = vld [vmem:[%s0] sm:$0xff]
    %v22 = vld [vmem:[%s0 + $0x8] sm:$0xff]
    %v23 = vpack.c.bf16 %v22, %v21
    %v24 = vld [vmem:[%s1] sm:$0xff]
    %v25 = vld [vmem:[%s1 + $0x8] sm:$0xff]
    %v26 = vld [vmem:[%s1 + $0x10] sm:$0xff]
    %v27 = vld [vmem:[%s1 + $0x18] sm:$0xff]
    %v28 = vld [vmem:[%s2] sm:$0x3]
    %v30 = vlaneseq
    %v31 = vshrl.u32 %v30, 7
    %v32 = vsub.s32 0, %v31
    %v33 = vrot.slane %v28, %v32
    %v34 = vlaneseq
    %v35 = vshrl.u32 %v34, 7
    %v36 = vsub.s32 1, %v35
    %v37 = vrot.slane %v28, %v36
    %v44 = vunpack.c.l.b16 %v24
    %v45 = vunpack.c.h.b16 %v24
    %v46 = vunpack.c.l.b16 %v25
    %v47 = vunpack.c.h.b16 %v25
    %v48 = vunpack.c.l.b16 %v26
    %v49 = vunpack.c.h.b16 %v26
    %v50 = vunpack.c.l.b16 %v27
    %v51 = vunpack.c.h.b16 %v27
    %v52 = vpack.c.b16 %v46, %v44
    %v53 = vpack.c.b16 %v47, %v45
    %v54 = vpack.c.b16 %v50, %v48
    %v55 = vpack.c.b16 %v51, %v49
    %vm60 = vcmask 261120
    %v62 = vsel %vm60, %v23, 0
    %64 = vmatprep.subr.bf16.mxu0 %v53
    %65 = vmatpush1.bf16.msra.mxu0 %v52
    %66 = vmatprep.subr.bf16.mxu0 %v55
    %67 = vmatpush1.bf16.msra.mxu0 %v54
    %68 = vmatprep.subr.bf16.mxu0 0
    %69 = vmatpush1.bf16.msra.mxu0 0
    %70 = vmatprep.subr.bf16.mxu0 0
    %71 = vmatpush1.bf16.msra.mxu0 0
    %72 = vmatprep.subr.bf16.mxu0 0
    %73 = vmatpush1.bf16.msra.mxu0 0
    %74 = vmatprep.subr.bf16.mxu0 0
    %75 = vmatpush1.bf16.msra.mxu0 0
    %76 = vmatprep.subr.bf16.mxu0 0
    %77 = vmatpush1.bf16.msra.mxu0 0
    %78 = vmatprep.subr.bf16.mxu0 0
    %79 = vmatpush1.bf16.msra.mxu0 0
    %80 = vmatprep.subr.bf16.mxu0 0
    %81 = vmatpush1.bf16.msra.mxu0 0
    %82 = vmatprep.subr.bf16.mxu0 0
    %83 = vmatpush1.bf16.msra.mxu0 0
    %84 = vmatprep.subr.bf16.mxu0 0
    %85 = vmatpush1.bf16.msra.mxu0 0
    %86 = vmatprep.subr.bf16.mxu0 0
    %87 = vmatpush1.bf16.msra.mxu0 0
    %88 = vmatprep.subr.bf16.mxu0 0
    %89 = vmatpush1.bf16.msra.mxu0 0
    %90 = vmatprep.subr.bf16.mxu0 0
    %91 = vmatpush1.bf16.msra.mxu0 0
    %92 = vmatprep.subr.bf16.mxu0 0
    %93 = vmatpush1.bf16.msra.mxu0 0
    %94 = vmatprep.subr.bf16.mxu0 0
    %95 = vmatpush1.bf16.msra.mxu0 0
    %96 = vmatprep.mubr.bf16.mxu0 0
    %97 = vmatmul.mubr.bf16.gmra.mrb[0].mxu0 %v62
    %v98 = vpop.f32.mrb[0].mxu0
    %v99 = vadd.f32 %v33, %v98
    %v100 = vpop.f32.mrb[0].mxu0
    %v101 = vadd.f32 %v37, %v100
    %v102 = vpop.f32.mrb[0].mxu0
    %v103 = vadd.f32 %v33, %v102
    %v104 = vpop.f32.mrb[0].mxu0
    %v105 = vadd.f32 %v37, %v104
    %106 = vdwg.mxu0
    %v107 = vmax.f32 %v99, 0.0
    %v108 = vmax.f32 %v101, 0.0
    %v109 = vmax.f32 %v103, 0.0
    %v110 = vmax.f32 %v105, 0.0
    %v111 = vpack.c.bf16 %v109, %v107
    %v112 = vpack.c.bf16 %v110, %v108
    %v113 = vld [vmem:[%s3] sm:$0xf]
    %v114 = vld [vmem:[%s3 + $0x4] sm:$0xf]
    %v115 = vld [vmem:[%s3 + $0x8] sm:$0xf]
    %v116 = vld [vmem:[%s3 + $0xc] sm:$0xf]
    %v117 = vld [vmem:[%s3 + $0x10] sm:$0xf]
    %v118 = vld [vmem:[%s3 + $0x14] sm:$0xf]
    %v119 = vld [vmem:[%s3 + $0x18] sm:$0xf]
    %v120 = vld [vmem:[%s3 + $0x1c] sm:$0xf]
    %v121 = vld [vmem:[%s3 + $0x20] sm:$0xf]
    %v122 = vld [vmem:[%s3 + $0x24] sm:$0xf]
    %v123 = vld [vmem:[%s3 + $0x28] sm:$0xf]
    %v124 = vld [vmem:[%s3 + $0x2c] sm:$0xf]
    %v125 = vld [vmem:[%s3 + $0x30] sm:$0xf]
    %v126 = vld [vmem:[%s3 + $0x34] sm:$0xf]
    %v127 = vld [vmem:[%s3 + $0x38] sm:$0xf]
    %v128 = vld [vmem:[%s3 + $0x3c] sm:$0xf]
    %v129 = vld [vmem:[%s3 + $0x40] sm:$0xf]
    %v130 = vld [vmem:[%s3 + $0x44] sm:$0xf]
    %v131 = vld [vmem:[%s3 + $0x48] sm:$0xf]
    %v132 = vld [vmem:[%s3 + $0x4c] sm:$0xf]
    %v133 = vld [vmem:[%s3 + $0x50] sm:$0xf]
    %v134 = vld [vmem:[%s3 + $0x54] sm:$0xf]
    %v135 = vld [vmem:[%s3 + $0x58] sm:$0xf]
    %v136 = vld [vmem:[%s3 + $0x5c] sm:$0xf]
    %v137 = vld [vmem:[%s3 + $0x60] sm:$0xf]
    %v138 = vld [vmem:[%s3 + $0x64] sm:$0xf]
    %v139 = vld [vmem:[%s3 + $0x68] sm:$0xf]
    %v140 = vld [vmem:[%s3 + $0x6c] sm:$0xf]
    %v141 = vld [vmem:[%s3 + $0x70] sm:$0xf]
    %v142 = vld [vmem:[%s3 + $0x74] sm:$0xf]
    %v143 = vld [vmem:[%s3 + $0x78] sm:$0xf]
    %v144 = vld [vmem:[%s3 + $0x7c] sm:$0xf]
    %v177 = vunpack.c.l.b16 %v113
    %v178 = vunpack.c.l.b16 %v114
    %v179 = vunpack.c.l.b16 %v115
    %v180 = vunpack.c.l.b16 %v116
    %v181 = vunpack.c.l.b16 %v117
    %v182 = vunpack.c.l.b16 %v118
    %v183 = vunpack.c.l.b16 %v119
    %v184 = vunpack.c.l.b16 %v120
    %v185 = vunpack.c.l.b16 %v121
    %v186 = vunpack.c.l.b16 %v122
    %v187 = vunpack.c.l.b16 %v123
    %v188 = vunpack.c.l.b16 %v124
    %v189 = vunpack.c.l.b16 %v125
    %v190 = vunpack.c.l.b16 %v126
    %v191 = vunpack.c.l.b16 %v127
    %v192 = vunpack.c.l.b16 %v128
    %v193 = vunpack.c.l.b16 %v129
    %v194 = vunpack.c.l.b16 %v130
    %v195 = vunpack.c.l.b16 %v131
    %v196 = vunpack.c.l.b16 %v132
    %v197 = vunpack.c.l.b16 %v133
    %v198 = vunpack.c.l.b16 %v134
    %v199 = vunpack.c.l.b16 %v135
    %v200 = vunpack.c.l.b16 %v136
    %v201 = vunpack.c.l.b16 %v137
    %v202 = vunpack.c.l.b16 %v138
    %v203 = vunpack.c.l.b16 %v139
    %v204 = vunpack.c.l.b16 %v140
    %v205 = vunpack.c.l.b16 %v141
    %v206 = vunpack.c.l.b16 %v142
    %v207 = vunpack.c.l.b16 %v143
    %v208 = vunpack.c.l.b16 %v144
    %v209 = vpack.c.b16 %v178, %v177
    %v210 = vpack.c.b16 %v180, %v179
    %v211 = vpack.c.b16 %v182, %v181
    %v212 = vpack.c.b16 %v184, %v183
    %v213 = vpack.c.b16 %v186, %v185
    %v214 = vpack.c.b16 %v188, %v187
    %v215 = vpack.c.b16 %v190, %v189
    %v216 = vpack.c.b16 %v192, %v191
    %v217 = vpack.c.b16 %v194, %v193
    %v218 = vpack.c.b16 %v196, %v195
    %v219 = vpack.c.b16 %v198, %v197
    %v220 = vpack.c.b16 %v200, %v199
    %v221 = vpack.c.b16 %v202, %v201
    %v222 = vpack.c.b16 %v204, %v203
    %v223 = vpack.c.b16 %v206, %v205
    %v224 = vpack.c.b16 %v208, %v207
    %241 = vmatprep.subr.bf16.mxu0 0
    %242 = vmatpush1.bf16.msra.mxu0 %v209
    %243 = vmatprep.subr.bf16.mxu0 0
    %244 = vmatpush1.bf16.msra.mxu0 %v210
    %245 = vmatprep.subr.bf16.mxu0 0
    %246 = vmatpush1.bf16.msra.mxu0 %v211
    %247 = vmatprep.subr.bf16.mxu0 0
    %248 = vmatpush1.bf16.msra.mxu0 %v212
    %249 = vmatprep.subr.bf16.mxu0 0
    %250 = vmatpush1.bf16.msra.mxu0 %v213
    %251 = vmatprep.subr.bf16.mxu0 0
    %252 = vmatpush1.bf16.msra.mxu0 %v214
    %253 = vmatprep.subr.bf16.mxu0 0
    %254 = vmatpush1.bf16.msra.mxu0 %v215
    %255 = vmatprep.subr.bf16.mxu0 0
    %256 = vmatpush1.bf16.msra.mxu0 %v216
    %257 = vmatprep.subr.bf16.mxu0 0
    %258 = vmatpush1.bf16.msra.mxu0 %v217
    %259 = vmatprep.subr.bf16.mxu0 0
    %260 = vmatpush1.bf16.msra.mxu0 %v218
    %261 = vmatprep.subr.bf16.mxu0 0
    %262 = vmatpush1.bf16.msra.mxu0 %v219
    %263 = vmatprep.subr.bf16.mxu0 0
    %264 = vmatpush1.bf16.msra.mxu0 %v220
    %265 = vmatprep.subr.bf16.mxu0 0
    %266 = vmatpush1.bf16.msra.mxu0 %v221
    %267 = vmatprep.subr.bf16.mxu0 0
    %268 = vmatpush1.bf16.msra.mxu0 %v222
    %269 = vmatprep.subr.bf16.mxu0 0
    %270 = vmatpush1.bf16.msra.mxu0 %v223
    %271 = vmatprep.subr.bf16.mxu0 0
    %272 = vmatpush1.bf16.msra.mxu0 %v224
    %273 = vmatprep.mubr.bf16.mxu0 %v112
    %274 = vmatmul.mubr.bf16.gmra.mrb[0].mxu0 %v111
    %v275 = vpop.f32.mrb[0].mxu0
    %v276 = vadd.f32 0.0, %v275
    %v277 = vpop.f32.mrb[0].mxu0
    %v278 = vpop.f32.mrb[0].mxu0
    %v279 = vadd.f32 0.0, %v278
    %v280 = vpop.f32.mrb[0].mxu0
    %281 = vdwg.mxu0
    %v282 = vld [vmem:[%s4] sm:$0x1]
    %v284 = vlaneseq
    %v285 = vshrl.u32 %v284, 7
    %v286 = vsub.s32 0, %v285
    %v287 = vrot.slane %v282, %v286
    %v289 = vadd.f32 %v276, %v287
    %v290 = vadd.f32 %v279, %v287
    %v291 = vxor.u32 %v289, 2147483648
    %v292 = vxor.u32 %v290, 2147483648
    %v293 = vmul.f32 %v291, 1.442695
    %v294 = vpow.pop %v293
    %v295 = vmul.f32 %v292, 1.442695
    %v296 = vpow.pop %v295
    %v297 = vadd.f32 %v294, 1.0
    %v298 = vadd.f32 %v296, 1.0
    %v299 = vrcp.pop %v297
    %v300 = vmul.f32 1.0, %v299
    %v301 = vrcp.pop %v298
    %v302 = vmul.f32 1.0, %v301
    %vm303 = vcmask 15360
    %304 = vst.msk [vmem:[#allocation2] sm:$0xff] %vm303, %v300
    %305 = vst.msk [vmem:[#allocation2 + $0x8] sm:$0xff] %vm303, %v302
    // Predicated region
    $region22: #{biclassification_forward.1} parent=1 // pred_check
      _
    $region23: #{biclassification_forward.1} parent=1 // pred_check_branch
      %307 = sbr.rel (0) target = $region25
    $region24: #{biclassification_forward.1} parent=1 // pred_region
      // Predicated region
      $region26: #{biclassification_forward.1} parent=24 // pred_check
        _
      $region27: #{biclassification_forward.1} parent=24 // pred_check_branch
        %309 = sbr.rel (0) target = $region29
      $region28: #{biclassification_forward.1} parent=24 // pred_region
        // Predicated region
        $region30: #{biclassification_forward.1} parent=28 // pred_check
          _
        $region31: #{biclassification_forward.1} parent=28 // pred_check_branch
          %311 = sbr.rel (0) target = $region33
        $region32: #{biclassification_forward.1} parent=28 // pred_region
          // Predicated region
          $region45: #{biclassification_forward.1} parent=32 // pred_check
            _
          $region46: #{biclassification_forward.1} parent=32 // pred_check_branch
            %326 = sbr.rel (0) target = $region48
          $region47: #{biclassification_forward.1} parent=32 // pred_region
            loop: start=0, step=1, limit=1
            $region49: #{biclassification_forward.1} parent=47 // loop_pre_header
              _
            $region50: #{biclassification_forward.1} parent=47 // loop_header
              %s328 = sphi 0, %s332
              %p329 = scmp.ge.s32.totalorder %s328, 1
              %s333 = sphi [#allocation2], [#allocation2]
              %s334 = sphi %s5, %s5
            $region51: #{biclassification_forward.1} parent=47 // loop_header_branch
              %331 = sbr.rel (%p329) target = $region55
            $region52: #{biclassification_forward.1} parent=47 // loop_body
              %v335 = vld [vmem:[%s333] sm:$0xff]
              %336 = vst [vmem:[%s334] sm:$0xff] %v335
            $region53: #{biclassification_forward.1} parent=47 // loop_footer
              %s332 = sadd.s32 1, %s328
            $region54: #{biclassification_forward.1} parent=47 // loop_footer_branch
              %327 = sbr.rel target = $region50
            $region55: #{biclassification_forward.1} parent=47 // loop_exit
              _
          $region48: #{biclassification_forward.1} parent=32 // pred_fallthru
            _
          // Predicated region
          $region56: #{biclassification_forward.1} parent=32 // pred_check
            _
          $region57: #{biclassification_forward.1} parent=32 // pred_check_branch
            %338 = sbr.rel target = $region59
          $region58: #{biclassification_forward.1} parent=32 // pred_region
            _
          $region59: #{biclassification_forward.1} parent=32 // pred_fallthru
            _
        $region33: #{biclassification_forward.1} parent=28 // pred_fallthru
          _
        // Predicated region
        $region34: #{biclassification_forward.1} parent=28 // pred_check
          _
        $region35: #{biclassification_forward.1} parent=28 // pred_check_branch
          %313 = sbr.rel target = $region37
        $region36: #{biclassification_forward.1} parent=28 // pred_region
          loop: start=0, step=1, limit=1
          $region38: #{biclassification_forward.1} parent=36 // loop_pre_header
            _
          $region39: #{biclassification_forward.1} parent=36 // loop_header
            %s316 = sphi 0, %s320
            %p317 = scmp.ge.s32.totalorder %s316, 1
            %s321 = sphi [#allocation2], [#allocation2]
            %s322 = sphi %s5, %s5
          $region40: #{biclassification_forward.1} parent=36 // loop_header_branch
            %319 = sbr.rel (%p317) target = $region44
          $region41: #{biclassification_forward.1} parent=36 // loop_body
            %v323 = vld [vmem:[%s321] sm:$0xff]
            %324 = vst [vmem:[%s322] sm:$0xff] %v323
          $region42: #{biclassification_forward.1} parent=36 // loop_footer
            %s320 = sadd.s32 1, %s316
          $region43: #{biclassification_forward.1} parent=36 // loop_footer_branch
            %315 = sbr.rel target = $region39
          $region44: #{biclassification_forward.1} parent=36 // loop_exit
            _
        $region37: #{biclassification_forward.1} parent=28 // pred_fallthru
          _
      $region29: #{biclassification_forward.1} parent=24 // pred_fallthru
        _
      %339 = vnop
    $region25: #{biclassification_forward.1} parent=1 // pred_fallthru
      _
    // Predicated region
    $region60: #{biclassification_forward.1} parent=1 // pred_check
      _
    $region61: #{biclassification_forward.1} parent=1 // pred_check_branch
      %341 = sbr.rel (0) target = $region63
    $region62: #{biclassification_forward.1} parent=1 // pred_region
      _
    $region63: #{biclassification_forward.1} parent=1 // pred_fallthru
      _

</llo_original>
